<compile_context>
chip_gen: v7x
topology: tpu7x:2x2x1
jax: 0.10.0
libtpu: 0.0.40
codegen_flags: <defaults>
</compile_context>

<pallas_src>
import functools

import jax
import jax.numpy as jnp
from jax import lax
from jax.experimental import pallas as pl
from jax.experimental.pallas import tpu as pltpu


_NEG_BIG = -3.0e38  # effectively -inf, but finite (avoids inf-inf -> NaN)


def _row_lse_kernel(x_ref, lse_ref, m_sc, l_sc, *, scale, num_classes, tile_c,
                    needs_mask):
    # x_ref:   (TILE_B, TILE_C) cosine similarities (f32 or bf16)
    # lse_ref: (TILE_B, 1) f32 per-row logsumexp(scale * x)
    # m_sc/l_sc: (TILE_B, 1) f32 running max / running sum-exp
    #
    # Padded rows of the last batch tile (B % tile_b != 0) process unspecified
    # block data; they stay per-row isolated and are dropped on writeback, so
    # they cannot contaminate valid rows.  Do not "fix" this with extra masking.
    j = pl.program_id(1)

    @pl.when(j == 0)
    def _():
        m_sc[...] = jnp.full_like(m_sc, _NEG_BIG)
        l_sc[...] = jnp.zeros_like(l_sc)

    x = x_ref[...].astype(jnp.float32)       # upcast in-kernel (bf16 inputs OK)
    out = x * jnp.float32(scale)

    if needs_mask:
        # Only emitted when tile_c does not divide C (ragged last class tile).
        tb, tc = out.shape
        col = j * tile_c + lax.broadcasted_iota(jnp.int32, (tb, tc), 1)
        out = jnp.where(col < num_classes, out, jnp.float32(_NEG_BIG))

    # Online (running) log-sum-exp over the class axis.
    m_prev = m_sc[...]
    m_new = jnp.maximum(m_prev, jnp.max(out, axis=1, keepdims=True))
    l_sc[...] = (l_sc[...] * jnp.exp(m_prev - m_new)
                 + jnp.sum(jnp.exp(out - m_new), axis=1, keepdims=True))
    m_sc[...] = m_new

    @pl.when(j == pl.num_programs(1) - 1)
    def _():
        lse_ref[...] = m_sc[...] + jnp.log(l_sc[...])


def _round_up(x, m):
    return ((x + m - 1) // m) * m


def _pick_tile_c(C, tile_c_max):
    """Pick a class-tile width; prefer no padded-column masking."""
    if C <= tile_c_max:
        return C, False                       # full extent: always legal, no mask
    cap = max(128, (tile_c_max // 128) * 128)
    best = None
    for cand in range(cap, 0, -128):          # largest 128-multiple divisor of C
        if C % cand == 0:
            best = cand
            break
    if best is not None and best >= min(512, cap):
        return best, False                    # divisor tile: no masking code at all
    return cap, (C % cap != 0)                # ragged fallback: mask padded columns


def amsoftmax_loss(cos_theta, target, *, scale, margin, is_amp=False,
                   tile_b_max=256, tile_c_max=None):
    """AMSoftmax loss.  cos_theta: (B, C) float (f32 or bf16), target: (B,) int."""
    B, C = cos_theta.shape
    itemsize = jnp.dtype(cos_theta.dtype).itemsize
    if tile_c_max is None:
        # ~8 MiB class-tile blocks (16 MiB double-buffered): fits the 32 MiB
        # scoped default on v6e/v7x and stays well under v7x's 64 MiB physical.
        tile_c_max = 8192 if itemsize >= 4 else 16384

    # Batch tile: multiple of 8 (or full B).  Split into >=2 tiles when B > 8 so
    # the "parallel" axis feeds both TensorCores on v7x.
    if B <= 8:
        tile_b = B
    else:
        tile_b = min(tile_b_max, _round_up(pl.cdiv(B, 2), 8))

    tile_c, needs_mask = _pick_tile_c(C, tile_c_max)
    grid = (pl.cdiv(B, tile_b), pl.cdiv(C, tile_c))

    kernel = functools.partial(
        _row_lse_kernel, scale=float(scale), num_classes=C, tile_c=tile_c,
        needs_mask=needs_mask,
    )

    # Enough scoped VMEM for the double-buffered input tile (+ headroom), capped
    # so v7x (64 MiB physical / TC) configs are never oversubscribed.
    block_bytes = tile_b * tile_c * itemsize
    vmem_limit = int(max(16 * 2**20, min(48 * 2**20, 2 * block_bytes + 4 * 2**20)))

    cost = pl.CostEstimate(
        flops=4 * B * C,
        transcendentals=B * C,
        bytes_accessed=itemsize * B * C + 8 * B,
    )

    lse0 = pl.pallas_call(
        kernel,
        out_shape=jax.ShapeDtypeStruct((B, 1), jnp.float32),
        grid_spec=pltpu.PrefetchScalarGridSpec(
            num_scalar_prefetch=0,
            grid=grid,
            in_specs=[pl.BlockSpec((tile_b, tile_c), lambda i, j: (i, j))],
            out_specs=pl.BlockSpec((tile_b, 1), lambda i, j: (i, 0)),
            scratch_shapes=[pltpu.VMEM((tile_b, 1), jnp.float32)] * 2,
        ),
        compiler_params=pltpu.CompilerParams(
            dimension_semantics=("parallel", "arbitrary"),
            vmem_limit_bytes=vmem_limit),
        cost_estimate=cost,
    )(cos_theta)
    lse0 = lse0[:, 0]                               # (B,) logsumexp(scale * x) per row

    # ---- per-row margin correction (tiny O(B) work, outside the kernel) ----
    sm = float(scale) * float(margin)
    tgt = target.reshape(-1, 1).astype(jnp.int32)
    a = float(scale) * jnp.take_along_axis(cos_theta, tgt, axis=1)[:, 0].astype(jnp.float32)
    # Replace the target term exp(a) by exp(a + delta) inside the softmax sum:
    #   non-amp: delta = -s*m ;  amp: delta = -2*s*m and the global +s*m shift of
    #   all non-target columns is added back to the LSE as a constant.
    delta = -(2.0 if is_amp else 1.0) * sm
    d = jnp.minimum(a - lse0, 0.0)                  # target's log-share of the sum (<= 0)
    lse = lse0 + jnp.log1p(jnp.exp(d) * jnp.expm1(jnp.float32(delta)))
    if is_amp:
        lse = lse + jnp.float32(sm)
    logpt = (a - jnp.float32(sm)) - lse
    return -jnp.mean(logpt)


def _reference(cos_theta, target, scale, margin, is_amp=False):
    # Pure-JAX reference matching the PyTorch forward.
    B, C = cos_theta.shape
    x = cos_theta.astype(jnp.float32)
    onehot = jax.nn.one_hot(target, C, dtype=jnp.float32)
    adjust = jnp.where(onehot > 0, -margin, margin if is_amp else 0.0)
    out = (x + adjust) * scale
    logsm = jax.nn.log_softmax(out, axis=1)
    logpt = jnp.take_along_axis(logsm, target.reshape(-1, 1), axis=1).reshape(-1)
    return -jnp.mean(logpt)


if __name__ == "__main__":
    scale, margin = 30.0, 0.35  # typical AMSoftmax hyperparameters
    key = jax.random.PRNGKey(0)

    # Case 1: small shapes, single block (full-extent tiles), is_amp=False.
    B1, C1 = 8, 32
    k1, k2, key = jax.random.split(key, 3)
    cos1 = jnp.tanh(jax.random.normal(k1, (B1, C1), dtype=jnp.float32))
    tgt1 = jax.random.randint(k2, (B1,), 0, C1, dtype=jnp.int32)
    loss1 = jax.block_until_ready(
        amsoftmax_loss(cos1, tgt1, scale=scale, margin=margin, is_amp=False))
    ref1 = _reference(cos1, tgt1, scale, margin, is_amp=False)
    assert jnp.allclose(loss1, ref1, atol=2e-4, rtol=1e-4), (loss1, ref1)

    # Case 2: tiled grid (2 batch x 2 class tiles), ragged class dim (exercises
    # the compile-time masking fallback), is_amp=True.
    B2, C2 = 16, 160
    k3, k4, key = jax.random.split(key, 3)
    cos2 = jnp.tanh(jax.random.normal(k3, (B2, C2), dtype=jnp.float32))
    tgt2 = jax.random.randint(k4, (B2,), 0, C2, dtype=jnp.int32)
    loss2 = jax.block_until_ready(
        amsoftmax_loss(cos2, tgt2, scale=scale, margin=margin, is_amp=True,
                       tile_b_max=8, tile_c_max=128))
    ref2 = _reference(cos2, tgt2, scale, margin, is_amp=True)
    assert jnp.allclose(loss2, ref2, atol=2e-4, rtol=1e-4), (loss2, ref2)

    # Case 3: bf16 input, class tile chosen as a divisor of C (no masking code).
    B3, C3 = 8, 256
    k5, k6 = jax.random.split(key)
    cos3 = jnp.tanh(jax.random.normal(k5, (B3, C3), dtype=jnp.float32)).astype(jnp.bfloat16)
    tgt3 = jax.random.randint(k6, (B3,), 0, C3, dtype=jnp.int32)
    loss3 = jax.block_until_ready(
        amsoftmax_loss(cos3, tgt3, scale=scale, margin=margin, is_amp=False,
                       tile_c_max=128))
    ref3 = _reference(cos3, tgt3, scale, margin, is_amp=False)
    assert jnp.allclose(loss3, ref3, atol=1e-3, rtol=1e-3), (loss3, ref3)

    print("KERNEL_OK")
</pallas_src>

<mosaic_0001>
module attributes {stable_mosaic.version = 11 : i64} {
  func.func @_row_lse_kernel(%arg0: i32, %arg1: i32, %arg2: memref<8x32xf32, #tpu.memory_space<vmem>>, %arg3: memref<8x1xf32, #tpu.memory_space<vmem>>, %arg4: memref<8x1xf32, #tpu.memory_space<vmem>>, %arg5: memref<8x1xf32, #tpu.memory_space<vmem>>) attributes {dimension_semantics = [#tpu.dimension_semantics<parallel>, #tpu.dimension_semantics<arbitrary>], iteration_bounds = array<i64: 1, 1>, scalar_prefetch = 0 : i64, scratch_operands = 2 : i64, tpu.core_type = #tpu.core_type<tc>, window_params = [{transform_indices = @transform_0, window_bounds = array<i64: 8, 32>}, {transform_indices = @transform_1, window_bounds = array<i64: 8, 1>}]} {
    %c0_i32 = arith.constant 0 : i32
    %0 = arith.cmpi eq, %arg1, %c0_i32 : i32
    %1 = arith.extui %0 : i1 to i32
    %c0_i32_0 = arith.constant 0 : i32
    %2 = arith.cmpi ne, %1, %c0_i32_0 : i32
    scf.if %2 {
      %cst_14 = arith.constant -3.000000e+38 : f32
      %25 = vector.broadcast %cst_14 : f32 to vector<8x1xf32>
      %c0_15 = arith.constant 0 : index
      %c0_16 = arith.constant 0 : index
      %26 = vector.load %arg4[%c0_15, %c0_16] : memref<8x1xf32, #tpu.memory_space<vmem>>, vector<8x1xf32>
      tpu.vector_store %arg4[%c0_15, %c0_16], %25 {strides = array<i32>} : memref<8x1xf32, #tpu.memory_space<vmem>>, vector<8x1xf32>,
      %cst_17 = arith.constant 0.000000e+00 : f32
      %27 = vector.broadcast %cst_17 : f32 to vector<8x1xf32>
      %c0_18 = arith.constant 0 : index
      %c0_19 = arith.constant 0 : index
      %28 = vector.load %arg5[%c0_18, %c0_19] : memref<8x1xf32, #tpu.memory_space<vmem>>, vector<8x1xf32>
      tpu.vector_store %arg5[%c0_18, %c0_19], %27 {strides = array<i32>} : memref<8x1xf32, #tpu.memory_space<vmem>>, vector<8x1xf32>,
    } else {
    }
    %c0 = arith.constant 0 : index
    %c0_1 = arith.constant 0 : index
    %3 = vector.load %arg2[%c0, %c0_1] : memref<8x32xf32, #tpu.memory_space<vmem>>, vector<8x32xf32>
    %cst = arith.constant 3.000000e+01 : f32
    %4 = vector.broadcast %cst : f32 to vector<8x32xf32>
    %5 = arith.mulf %3, %4 : vector<8x32xf32>
    %c0_2 = arith.constant 0 : index
    %c0_3 = arith.constant 0 : index
    %6 = vector.load %arg4[%c0_2, %c0_3] : memref<8x1xf32, #tpu.memory_space<vmem>>, vector<8x1xf32>
    %cst_4 = arith.constant dense<0xFF800000> : vector<8xf32>
    %7 = vector.multi_reduction <maximumf>, %5, %cst_4 [1] : vector<8x32xf32> to vector<8xf32>
    %8 = vector.shape_cast %7 : vector<8xf32> to vector<8x1xf32>
    %9 = arith.maximumf %6, %8 : vector<8x1xf32>
    %c0_5 = arith.constant 0 : index
    %c0_6 = arith.constant 0 : index
    %10 = vector.load %arg5[%c0_5, %c0_6] : memref<8x1xf32, #tpu.memory_space<vmem>>, vector<8x1xf32>
    %11 = arith.subf %6, %9 : vector<8x1xf32>
    %12 = math.exp %11 : vector<8x1xf32>
    %13 = arith.mulf %10, %12 : vector<8x1xf32>
    %14 = vector.broadcast %9 : vector<8x1xf32> to vector<8x32xf32>
    %15 = arith.subf %5, %14 : vector<8x32xf32>
    %16 = math.exp %15 : vector<8x32xf32>
    %cst_7 = arith.constant dense<0.000000e+00> : vector<8xf32>
    %17 = vector.multi_reduction <add>, %16, %cst_7 [1] : vector<8x32xf32> to vector<8xf32>
    %18 = vector.shape_cast %17 : vector<8xf32> to vector<8x1xf32>
    %19 = arith.addf %13, %18 : vector<8x1xf32>
    %c0_8 = arith.constant 0 : index
    %c0_9 = arith.constant 0 : index
    %20 = vector.load %arg5[%c0_8, %c0_9] : memref<8x1xf32, #tpu.memory_space<vmem>>, vector<8x1xf32>
    tpu.vector_store %arg5[%c0_8, %c0_9], %19 {strides = array<i32>} : memref<8x1xf32, #tpu.memory_space<vmem>>, vector<8x1xf32>,
    %c0_10 = arith.constant 0 : index
    %c0_11 = arith.constant 0 : index
    %21 = vector.load %arg4[%c0_10, %c0_11] : memref<8x1xf32, #tpu.memory_space<vmem>>, vector<8x1xf32>
    tpu.vector_store %arg4[%c0_10, %c0_11], %9 {strides = array<i32>} : memref<8x1xf32, #tpu.memory_space<vmem>>, vector<8x1xf32>,
    %c0_i32_12 = arith.constant 0 : i32
    %22 = arith.cmpi eq, %arg1, %c0_i32_12 : i32
    %23 = arith.extui %22 : i1 to i32
    %c0_i32_13 = arith.constant 0 : i32
    %24 = arith.cmpi ne, %23, %c0_i32_13 : i32
    scf.if %24 {
      %c0_14 = arith.constant 0 : index
      %c0_15 = arith.constant 0 : index
      %25 = vector.load %arg4[%c0_14, %c0_15] : memref<8x1xf32, #tpu.memory_space<vmem>>, vector<8x1xf32>
      %c0_16 = arith.constant 0 : index
      %c0_17 = arith.constant 0 : index
      %26 = vector.load %arg5[%c0_16, %c0_17] : memref<8x1xf32, #tpu.memory_space<vmem>>, vector<8x1xf32>
      %27 = math.log %26 : vector<8x1xf32>
      %28 = arith.addf %25, %27 : vector<8x1xf32>
      %c0_18 = arith.constant 0 : index
      %c0_19 = arith.constant 0 : index
      %29 = vector.load %arg3[%c0_18, %c0_19] : memref<8x1xf32, #tpu.memory_space<vmem>>, vector<8x1xf32>
      tpu.vector_store %arg3[%c0_18, %c0_19], %28 {strides = array<i32>} : memref<8x1xf32, #tpu.memory_space<vmem>>, vector<8x1xf32>,
    } else {
    }
    return
  }
  func.func @transform_0(%arg0: i32, %arg1: i32) -> (i32, i32) {
    %c0_i32 = arith.constant 0 : i32
    return %arg0, %arg1 : i32, i32
  }
  func.func @transform_1(%arg0: i32, %arg1: i32) -> (i32, i32) {
    %c0_i32 = arith.constant 0 : i32
    %c0_i32_0 = arith.constant 0 : i32
    return %arg0, %c0_i32 : i32, i32
  }
}

</mosaic_0001>

<llo_original>
// kernel: tpu_custom_call.1
$region0: #{tpu_custom_call.1}
  #allocation0 [shape = 'u32[]', space=smem, size = 0x4, offset = 0x4, fixed_abs, tag = 'smem constant byte address 0x4 - core index']
  #allocation1 [shape = 'u32[144,128]{1,0:T(1,128)}', space=vmem, size = 0x12000, scoped, tag = 'internal scratch']
  #allocation2 [shape = 'f32[8,1]{1,0:T(8,128)}', space=vmem, size = 0x1000, scoped, tag = 'scratch operand']
  #allocation3 [shape = 'f32[8,1]{1,0:T(8,128)}', space=vmem, size = 0x1000, scoped, tag = 'scratch operand']
  %s0 = inlined_call_operand.hbm [shape: f32[8,32], index: 0, kind: input, shape index: {}]
  %s1 = inlined_call_operand.vmem [shape: f32[8,1], index: 1, kind: output, shape index: {}]
  %s2 = sld [smem:[#allocation0]]
  $region26: #{tpu_custom_call.1} parent=0
    _
  %s4 = ssub.s32 1, %s2
  %s5 = scalar_select 0, %s4, %s2
  $region1: #{tpu_custom_call.1} parent=0
    #allocation4 [shape = 'u8[4096]{0}', space=vmem, size = 0x1000, scoped, tag = 'input window, operand 0, single buffered']
    #allocation5 [shape = 's32[1]{0}', space=sflag, size = 0x4, scoped, tag = 'scoped memory for tpu_custom_call.1']
    %6 = vsyncpa [#allocation5], 0
    // Predicated region
    $region2: #{tpu_custom_call.1} parent=1 // pred_check
      _
    $region3: #{tpu_custom_call.1} parent=1 // pred_check_branch
      %8 = sbr.rel (0) target = $region5
    $region4: #{tpu_custom_call.1} parent=1 // pred_region
      %s10 = ssub.s32 128, 128
      %11 = vsyncadd [#allocation5], %s10
      %s13 = sshll.u32 [#allocation4], 4
      %s14 = int_to_ptr.vmem [resolvable:$true] %s13
      %16 = dma.hbm_to_vmem [thread:$0]  %s0, 128, %s14, [#allocation5]
    $region5: #{tpu_custom_call.1} parent=1 // pred_fallthru
      _
    // Predicated region
    $region6: #{tpu_custom_call.1} parent=1 // pred_check
      _
    $region7: #{tpu_custom_call.1} parent=1 // pred_check_branch
      %18 = sbr.rel (0) target = $region9
    $region8: #{tpu_custom_call.1} parent=1 // pred_region
      %19 = dma.done [#allocation5], 128
    $region9: #{tpu_custom_call.1} parent=1 // pred_fallthru
      _
    %p20 = scmp.eq.s32.totalorder 0, 0
    // Predicated region
    $region10: #{tpu_custom_call.1} parent=1 // pred_check
      %p21 = pneg %p20
    $region11: #{tpu_custom_call.1} parent=1 // pred_check_branch
      %23 = sbr.rel (%p21) target = $region13
    $region12: #{tpu_custom_call.1} parent=1 // pred_region
      %vm24 = vcmask 7168
      %25 = vst.msk [vmem:[#allocation2] sm:$0xff] %vm24, -3e+38
      %26 = vst.msk [vmem:[#allocation3] sm:$0xff] %vm24, 0.0
    $region13: #{tpu_custom_call.1} parent=1 // pred_fallthru
      _
    %v27 = vld [vmem:[#allocation4] sm:$0xff]
    %v28 = vmul.f32 %v27, 30.0
    %v29 = vld [vmem:[#allocation2] sm:$0xff]
    %vm30 = vcmask 261120
    %v31 = vsel %vm30, %v28, -inf
    %32 = vmax.xlane.f32.xlu0 %v31
    %v33 = vpop.xlane.xlu0 %32
    %v34 = vmax.f32 %v29, %v33
    %v35 = vld [vmem:[#allocation3] sm:$0xff]
    %v36 = vsub.f32 %v29, %v34
    %v37 = vmul.f32 %v36, 1.442695
    %v38 = vpow.pop %v37
    %v39 = vmul.f32 %v35, %v38
    %41 = vset.pattern.permute.xlu0 0
    %42 = vperm.xlu0 %41, %v34
    %v43 = vpop.permute.xlu0 %42
    %v45 = vsub.f32 %v28, %v43
    %v46 = vmul.f32 %v45, 1.442695
    %v47 = vpow.pop %v46
    %v48 = vsel %vm30, %v47, 0.0
    %49 = vadd.xlane.f32.xlu0 %v48
    %v50 = vpop.xlane.xlu0 %49
    %v51 = vadd.f32 %v39, %v50
    %vm52 = vcmask 7168
    %53 = vst.msk [vmem:[#allocation3] sm:$0xff] %vm52, %v51
    %54 = vst.msk [vmem:[#allocation2] sm:$0xff] %vm52, %v34
    // Predicated region
    $region14: #{tpu_custom_call.1} parent=1 // pred_check
      %p55 = pneg %p20
    $region15: #{tpu_custom_call.1} parent=1 // pred_check_branch
      %57 = sbr.rel (%p55) target = $region17
    $region16: #{tpu_custom_call.1} parent=1 // pred_region
      %v58 = vld [vmem:[#allocation2] sm:$0xff]
      %v59 = vld [vmem:[#allocation3] sm:$0xff]
      %v60 = vlog2.pop %v59
      %v61 = vmul.f32 %v60, 0.6931472
      %v62 = vadd.f32 %v58, %v61
      %63 = vst.msk [vmem:[%s1] sm:$0xff] %vm52, %v62
    $region17: #{tpu_custom_call.1} parent=1 // pred_fallthru
      _
    // Predicated region
    $region18: #{tpu_custom_call.1} parent=1 // pred_check
      _
    $region19: #{tpu_custom_call.1} parent=1 // pred_check_branch
      %65 = sbr.rel (0) target = $region21
    $region20: #{tpu_custom_call.1} parent=1 // pred_region
      _
    $region21: #{tpu_custom_call.1} parent=1 // pred_fallthru
      _
    // Predicated region
    $region22: #{tpu_custom_call.1} parent=1 // pred_check
      _
    $region23: #{tpu_custom_call.1} parent=1 // pred_check_branch
      %67 = sbr.rel (0) target = $region25
    $region24: #{tpu_custom_call.1} parent=1 // pred_region
      _
    $region25: #{tpu_custom_call.1} parent=1 // pred_fallthru
      _
    %68 = vsyncpa [#allocation5], 1

</llo_original>
